<compile_context>
chip_gen: v6e
topology: v6e:2x2x1
jax: 0.10.0
libtpu: 0.0.40
codegen_flags: <defaults>
</compile_context>

<pallas_src>
import jax
import jax.numpy as jnp
from jax.experimental import pallas as pl
from jax.experimental.pallas import tpu as pltpu

# padded hidden widths (lane multiples of 128)
H1, H2, H3 = 128, 128, 256


def _round_up(x, m):
    return (x + m - 1) // m * m


def _leaky_relu(x, slope=0.01):
    return jnp.where(x > 0, x, slope * x)


def _layers123(x_ref, w1_ref, b1_ref, w2_ref, b2_ref, w3_ref, b3_ref):
    """Layers 1-3 (bf16 matmul, f32 accumulate) -> bf16 h3 tile [tb, H3]."""
    h = jnp.dot(x_ref[...].astype(jnp.bfloat16), w1_ref[...],
                preferred_element_type=jnp.float32) + b1_ref[...]
    h = _leaky_relu(h)                               # Dropout(0.2) -> identity (eval)

    h = jnp.dot(h.astype(jnp.bfloat16), w2_ref[...],
                preferred_element_type=jnp.float32) + b2_ref[...]
    h = _leaky_relu(h)                               # Dropout(0.3) -> identity (eval)

    h = jnp.dot(h.astype(jnp.bfloat16), w3_ref[...],
                preferred_element_type=jnp.float32) + b3_ref[...]
    return _leaky_relu(h).astype(jnp.bfloat16)       # Dropout(0.4) -> identity (eval)


def dec_kernel_cached(x_ref,
                      w1_ref, b1_ref,
                      w2_ref, b2_ref,
                      w3_ref, b3_ref,
                      w4_ref, b4_ref,
                      o_ref,
                      h3_ref):
    """Layers 1-3 cached per batch tile (j innermost, sequential)."""
    j = pl.program_id(1)

    @pl.when(j == 0)
    def _():
        h3_ref[...] = _layers123(x_ref, w1_ref, b1_ref, w2_ref, b2_ref,
                                 w3_ref, b3_ref)

    h4 = jnp.dot(h3_ref[...], w4_ref[...],
                 preferred_element_type=jnp.float32) + b4_ref[...]
    o_ref[...] = jnp.maximum(h4, 0.0).astype(o_ref.dtype)   # Dropout(0.5)->id, ReLU


def dec_kernel_recompute(x_ref,
                         w1_ref, b1_ref,
                         w2_ref, b2_ref,
                         w3_ref, b3_ref,
                         w4_ref, b4_ref,
                         o_ref):
    """Layers 1-3 recomputed per step; both grid axes can be 'parallel'."""
    h3 = _layers123(x_ref, w1_ref, b1_ref, w2_ref, b2_ref, w3_ref, b3_ref)
    h4 = jnp.dot(h3, w4_ref[...],
                 preferred_element_type=jnp.float32) + b4_ref[...]
    o_ref[...] = jnp.maximum(h4, 0.0).astype(o_ref.dtype)   # Dropout(0.5)->id, ReLU


def _pad2(a, rows, cols, dtype):
    """Zero-pad a 2-D array to (rows, cols) and cast."""
    out = jnp.zeros((rows, cols), dtype)
    return out.at[:a.shape[0], :a.shape[1]].set(a.astype(dtype))


def george_sae_dropout_forward(x, params, *, tb=None, tn=None, cache_h3=None,
                               out_dtype=jnp.float32):
    """forward(x) == decode(x). x: [B, z_dim] float32 -> [B, n_features] out_dtype."""
    (w1, b1), (w2, b2), (w3, b3), (w4, b4) = params
    B, z_dim = x.shape
    n_features = w4.shape[1]
    out_itemsize = jnp.dtype(out_dtype).itemsize

    # --- tile sizes ------------------------------------------------------------
    nf_pad = _round_up(n_features, 128)
    if tn is None:
        if nf_pad <= 2048:
            tn = nf_pad                       # single lane-dense column tile
        else:
            # biggest tile (>= 512) that wastes the least column padding
            tn = min((2048, 1024, 512), key=lambda c: (_round_up(nf_pad, c), -c))
    nf_pad = _round_up(nf_pad, tn)

    if tb is None:
        tb = 512 if B >= 512 else _round_up(B, 8)
    b_pad = _round_up(B, tb)

    n_i = b_pad // tb                  # batch tiles
    n_j = nf_pad // tn                 # output-column tiles

    if cache_h3 is None:
        # cache layers 1-3 only when the inner j loop actually repeats AND the
        # batch axis alone already provides >= 2 parallel tiles (v7x megacore);
        # otherwise recompute so both axes can be "parallel".
        cache_h3 = (n_j > 1) and (n_i >= 2)

    # --- zero-pad / cast operands (exact through matmul+bias+LeakyReLU) --------
    w1p = _pad2(w1, z_dim, H1, jnp.bfloat16);  b1p = _pad2(b1, 1, H1, jnp.float32)
    w2p = _pad2(w2, H1, H2, jnp.bfloat16);     b2p = _pad2(b2, 1, H2, jnp.float32)
    w3p = _pad2(w3, H2, H3, jnp.bfloat16);     b3p = _pad2(b3, 1, H3, jnp.float32)
    w4p = _pad2(w4, H3, nf_pad, jnp.bfloat16); b4p = _pad2(b4, 1, nf_pad, jnp.float32)

    xp = x if b_pad == B else jnp.zeros((b_pad, z_dim), x.dtype).at[:B].set(x)

    # --- cost estimate (advisory) ----------------------------------------------
    small_flops = 2 * (z_dim * H1 + H1 * H2 + H2 * H3)        # per padded row, L1-3
    big_flops = 2 * H3 * nf_pad                               # per padded row, L4
    l123_repeats = 1 if cache_h3 else n_j
    flops = b_pad * (small_flops * l123_repeats + big_flops)
    bytes_accessed = (
        b_pad * z_dim * 4                                     # x
        + n_i * (H3 * nf_pad * 2 + nf_pad * 4)                # w4/b4 re-streamed per batch tile
        + b_pad * nf_pad * out_itemsize                       # output
        + (z_dim * H1 + H1 * H2 + H2 * H3) * 2 + (H1 + H2 + H3) * 4
    )
    cost = pl.CostEstimate(flops=flops, transcendentals=0,
                           bytes_accessed=bytes_accessed)

    # --- VMEM budget (double-buffered tiles + resident small weights) ----------
    tile_vmem = (
        2 * tb * z_dim * 4                                    # x tile
        + 2 * (H3 * tn * 2 + tn * 4)                          # w4/b4 tiles
        + 2 * tb * tn * out_itemsize                          # out tile
        + (tb * H3 * 2 if cache_h3 else 0)                    # bf16 h3 scratch
        + (z_dim * H1 + H1 * H2 + H2 * H3) * 2 + (H1 + H2 + H3) * 4
    )
    vmem_limit = min(max(32 * 1024 * 1024, int(tile_vmem * 1.25)),
                     48 * 1024 * 1024)   # stay well under v7x's 64 MiB physical

    const = lambda i, j: (0, 0)   # resident weights/biases: fixed block index
    in_specs = [
        pl.BlockSpec((tb, z_dim), lambda i, j: (i, 0)),   # x
        pl.BlockSpec((z_dim, H1), const),                 # w1
        pl.BlockSpec((1, H1), const),                     # b1
        pl.BlockSpec((H1, H2), const),                    # w2
        pl.BlockSpec((1, H2), const),                     # b2
        pl.BlockSpec((H2, H3), const),                    # w3
        pl.BlockSpec((1, H3), const),                     # b3
        pl.BlockSpec((H3, tn), lambda i, j: (0, j)),      # w4 (tiled over out cols)
        pl.BlockSpec((1, tn), lambda i, j: (0, j)),       # b4
    ]
    out_spec = pl.BlockSpec((tb, tn), lambda i, j: (i, j))

    if cache_h3:
        kernel = dec_kernel_cached
        scratch_shapes = [pltpu.VMEM((tb, H3), jnp.bfloat16)]   # cached bf16 h3
        dim_sem = ("parallel", "arbitrary")   # j must stay sequential (pl.when(j==0))
    else:
        kernel = dec_kernel_recompute
        scratch_shapes = []
        dim_sem = ("parallel", "parallel")    # both axes shardable across TCs

    out_padded = pl.pallas_call(
        kernel,
        out_shape=jax.ShapeDtypeStruct((b_pad, nf_pad), out_dtype),
        grid=(n_i, n_j),
        in_specs=in_specs,
        out_specs=out_spec,
        scratch_shapes=scratch_shapes,
        compiler_params=pltpu.CompilerParams(
            dimension_semantics=dim_sem,
            vmem_limit_bytes=vmem_limit,
        ),
        cost_estimate=cost,
    )(xp, w1p, b1p, w2p, b2p, w3p, b3p, w4p, b4p)

    return out_padded[:B, :n_features]


def init_params(key, z_dim, n_features):
    """Deterministic init matching the dec_nn Linear shapes (stored as [in, out])."""
    dims = [(z_dim, 50), (50, 100), (100, 200), (200, n_features)]
    params = []
    for i, (fan_in, fan_out) in enumerate(dims):
        kw, kb = jax.random.split(jax.random.fold_in(key, i))
        bound = 1.0 / jnp.sqrt(fan_in)
        w = jax.random.uniform(kw, (fan_in, fan_out), jnp.float32, -bound, bound)
        b = jax.random.uniform(kb, (1, fan_out), jnp.float32, -bound, bound)
        params.append((w, b))
    return params


def ref_forward(x, params):
    """Pure-JAX reference with the same bf16-weight / f32-accumulate semantics."""
    def lin(h, w, b):
        return jnp.dot(h.astype(jnp.bfloat16), w.astype(jnp.bfloat16),
                       preferred_element_type=jnp.float32) + b.astype(jnp.float32)
    (w1, b1), (w2, b2), (w3, b3), (w4, b4) = params
    h = _leaky_relu(lin(x, w1, b1))
    h = _leaky_relu(lin(h, w2, b2))
    h = _leaky_relu(lin(h, w3, b3))
    return jnp.maximum(lin(h, w4, b4), 0.0)


if __name__ == "__main__":
    key = jax.random.PRNGKey(0)
    batch, z_dim, n_features = 24, 16, 300

    k_x, k_p = jax.random.split(key)
    x = jax.random.normal(k_x, (batch, z_dim), dtype=jnp.float32)
    params = init_params(k_p, z_dim, n_features)

    expected = ref_forward(x, params)

    # 1) default auto-tiled path: single (1,1) grid step -> recompute kernel,
    #    both grid axes "parallel".
    out = george_sae_dropout_forward(x, params)
    jax.block_until_ready(out)
    assert out.shape == (batch, n_features)
    assert jnp.allclose(out, expected, atol=1e-3, rtol=1e-3), (
        float(jnp.max(jnp.abs(out - expected))))

    # 2) forced small tiles: (3, 3) grid, exercises the cached bf16-h3 path,
    #    the pl.when(j == 0) gate, and the output padding slice-back.
    out2 = george_sae_dropout_forward(x, params, tb=8, tn=128)
    jax.block_until_ready(out2)
    assert jnp.allclose(out2, expected, atol=1e-3, rtol=1e-3), (
        float(jnp.max(jnp.abs(out2 - expected))))

    print("KERNEL_OK")
</pallas_src>

<mosaic_0001>
module attributes {stable_mosaic.version = 11 : i64} {
  func.func @dec_kernel_recompute(%arg0: i32, %arg1: i32, %arg2: memref<24x16xf32, #tpu.memory_space<vmem>>, %arg3: memref<16x128xbf16, #tpu.memory_space<vmem>>, %arg4: memref<1x128xf32, #tpu.memory_space<vmem>>, %arg5: memref<128x128xbf16, #tpu.memory_space<vmem>>, %arg6: memref<1x128xf32, #tpu.memory_space<vmem>>, %arg7: memref<128x256xbf16, #tpu.memory_space<vmem>>, %arg8: memref<1x256xf32, #tpu.memory_space<vmem>>, %arg9: memref<256x384xbf16, #tpu.memory_space<vmem>>, %arg10: memref<1x384xf32, #tpu.memory_space<vmem>>, %arg11: memref<24x384xf32, #tpu.memory_space<vmem>>) attributes {dimension_semantics = [#tpu.dimension_semantics<parallel>, #tpu.dimension_semantics<parallel>], iteration_bounds = array<i64: 1, 1>, scalar_prefetch = 0 : i64, scratch_operands = 0 : i64, tpu.core_type = #tpu.core_type<tc>, window_params = [{transform_indices = @transform_0, window_bounds = array<i64: 24, 16>}, {pipeline_mode = #tpu.pipeline_mode<synchronous>, transform_indices = @transform_1, window_bounds = array<i64: 16, 128>}, {pipeline_mode = #tpu.pipeline_mode<synchronous>, transform_indices = @transform_2, window_bounds = array<i64: 1, 128>}, {pipeline_mode = #tpu.pipeline_mode<synchronous>, transform_indices = @transform_3, window_bounds = array<i64: 128, 128>}, {pipeline_mode = #tpu.pipeline_mode<synchronous>, transform_indices = @transform_4, window_bounds = array<i64: 1, 128>}, {pipeline_mode = #tpu.pipeline_mode<synchronous>, transform_indices = @transform_5, window_bounds = array<i64: 128, 256>}, {pipeline_mode = #tpu.pipeline_mode<synchronous>, transform_indices = @transform_6, window_bounds = array<i64: 1, 256>}, {transform_indices = @transform_7, window_bounds = array<i64: 256, 384>}, {transform_indices = @transform_8, window_bounds = array<i64: 1, 384>}, {transform_indices = @transform_9, window_bounds = array<i64: 24, 384>}]} {
    %c0 = arith.constant 0 : index
    %c0_0 = arith.constant 0 : index
    %0 = vector.load %arg2[%c0, %c0_0] : memref<24x16xf32, #tpu.memory_space<vmem>>, vector<24x16xf32>
    %1 = arith.truncf %0 : vector<24x16xf32> to vector<24x16xbf16>
    %c0_1 = arith.constant 0 : index
    %c0_2 = arith.constant 0 : index
    %2 = vector.load %arg3[%c0_1, %c0_2] : memref<16x128xbf16, #tpu.memory_space<vmem>>, vector<16x128xbf16>
    %cst = arith.constant dense<0.000000e+00> : vector<24x128xf32>
    %3 = tpu.matmul %1, %2, %cst {dimension_numbers = #tpu.dot_dimension_numbers<[1], [0], [0], [1], [0, 0, 1, 1], [], []>} : vector<24x16xbf16>, vector<16x128xbf16>, vector<24x128xf32> -> vector<24x128xf32>
    %c0_3 = arith.constant 0 : index
    %c0_4 = arith.constant 0 : index
    %4 = vector.load %arg4[%c0_3, %c0_4] : memref<1x128xf32, #tpu.memory_space<vmem>>, vector<1x128xf32>
    %5 = vector.broadcast %4 : vector<1x128xf32> to vector<24x128xf32>
    %6 = arith.addf %3, %5 : vector<24x128xf32>
    %cst_5 = arith.constant 0.000000e+00 : f32
    %7 = vector.broadcast %cst_5 : f32 to vector<24x128xf32>
    %8 = arith.cmpf ogt, %6, %7 : vector<24x128xf32>
    %cst_6 = arith.constant 0.00999999977 : f32
    %9 = vector.broadcast %cst_6 : f32 to vector<24x128xf32>
    %10 = arith.mulf %9, %6 : vector<24x128xf32>
    %11 = arith.select %8, %6, %10 : vector<24x128xi1>, vector<24x128xf32>
    %12 = arith.truncf %11 : vector<24x128xf32> to vector<24x128xbf16>
    %c0_7 = arith.constant 0 : index
    %c0_8 = arith.constant 0 : index
    %13 = vector.load %arg5[%c0_7, %c0_8] : memref<128x128xbf16, #tpu.memory_space<vmem>>, vector<128x128xbf16>
    %cst_9 = arith.constant dense<0.000000e+00> : vector<24x128xf32>
    %14 = tpu.matmul %12, %13, %cst_9 {dimension_numbers = #tpu.dot_dimension_numbers<[1], [0], [0], [1], [0, 0, 1, 1], [], []>} : vector<24x128xbf16>, vector<128x128xbf16>, vector<24x128xf32> -> vector<24x128xf32>
    %c0_10 = arith.constant 0 : index
    %c0_11 = arith.constant 0 : index
    %15 = vector.load %arg6[%c0_10, %c0_11] : memref<1x128xf32, #tpu.memory_space<vmem>>, vector<1x128xf32>
    %16 = vector.broadcast %15 : vector<1x128xf32> to vector<24x128xf32>
    %17 = arith.addf %14, %16 : vector<24x128xf32>
    %cst_12 = arith.constant 0.000000e+00 : f32
    %18 = vector.broadcast %cst_12 : f32 to vector<24x128xf32>
    %19 = arith.cmpf ogt, %17, %18 : vector<24x128xf32>
    %cst_13 = arith.constant 0.00999999977 : f32
    %20 = vector.broadcast %cst_13 : f32 to vector<24x128xf32>
    %21 = arith.mulf %20, %17 : vector<24x128xf32>
    %22 = arith.select %19, %17, %21 : vector<24x128xi1>, vector<24x128xf32>
    %23 = arith.truncf %22 : vector<24x128xf32> to vector<24x128xbf16>
    %c0_14 = arith.constant 0 : index
    %c0_15 = arith.constant 0 : index
    %24 = vector.load %arg7[%c0_14, %c0_15] : memref<128x256xbf16, #tpu.memory_space<vmem>>, vector<128x256xbf16>
    %cst_16 = arith.constant dense<0.000000e+00> : vector<24x256xf32>
    %25 = tpu.matmul %23, %24, %cst_16 {dimension_numbers = #tpu.dot_dimension_numbers<[1], [0], [0], [1], [0, 0, 1, 1], [], []>} : vector<24x128xbf16>, vector<128x256xbf16>, vector<24x256xf32> -> vector<24x256xf32>
    %c0_17 = arith.constant 0 : index
    %c0_18 = arith.constant 0 : index
    %26 = vector.load %arg8[%c0_17, %c0_18] : memref<1x256xf32, #tpu.memory_space<vmem>>, vector<1x256xf32>
    %27 = vector.broadcast %26 : vector<1x256xf32> to vector<24x256xf32>
    %28 = arith.addf %25, %27 : vector<24x256xf32>
    %cst_19 = arith.constant 0.000000e+00 : f32
    %29 = vector.broadcast %cst_19 : f32 to vector<24x256xf32>
    %30 = arith.cmpf ogt, %28, %29 : vector<24x256xf32>
    %cst_20 = arith.constant 0.00999999977 : f32
    %31 = vector.broadcast %cst_20 : f32 to vector<24x256xf32>
    %32 = arith.mulf %31, %28 : vector<24x256xf32>
    %33 = arith.select %30, %28, %32 : vector<24x256xi1>, vector<24x256xf32>
    %34 = arith.truncf %33 : vector<24x256xf32> to vector<24x256xbf16>
    %c0_21 = arith.constant 0 : index
    %c0_22 = arith.constant 0 : index
    %35 = vector.load %arg9[%c0_21, %c0_22] : memref<256x384xbf16, #tpu.memory_space<vmem>>, vector<256x384xbf16>
    %cst_23 = arith.constant dense<0.000000e+00> : vector<24x384xf32>
    %36 = tpu.matmul %34, %35, %cst_23 {dimension_numbers = #tpu.dot_dimension_numbers<[1], [0], [0], [1], [0, 0, 1, 1], [], []>} : vector<24x256xbf16>, vector<256x384xbf16>, vector<24x384xf32> -> vector<24x384xf32>
    %c0_24 = arith.constant 0 : index
    %c0_25 = arith.constant 0 : index
    %37 = vector.load %arg10[%c0_24, %c0_25] : memref<1x384xf32, #tpu.memory_space<vmem>>, vector<1x384xf32>
    %38 = vector.broadcast %37 : vector<1x384xf32> to vector<24x384xf32>
    %39 = arith.addf %36, %38 : vector<24x384xf32>
    %cst_26 = arith.constant 0.000000e+00 : f32
    %40 = vector.broadcast %cst_26 : f32 to vector<24x384xf32>
    %41 = arith.maximumf %39, %40 : vector<24x384xf32>
    %c0_27 = arith.constant 0 : index
    %c0_28 = arith.constant 0 : index
    %42 = vector.load %arg11[%c0_27, %c0_28] : memref<24x384xf32, #tpu.memory_space<vmem>>, vector<24x384xf32>
    tpu.vector_store %arg11[%c0_27, %c0_28], %41 {strides = array<i32>} : memref<24x384xf32, #tpu.memory_space<vmem>>, vector<24x384xf32>,
    return
  }
  func.func @transform_0(%arg0: i32, %arg1: i32) -> (i32, i32) {
    %c0_i32 = arith.constant 0 : i32
    %c0_i32_0 = arith.constant 0 : i32
    return %arg0, %c0_i32 : i32, i32
  }
  func.func @transform_1(%arg0: i32, %arg1: i32) -> (i32, i32) {
    %c0_i32 = arith.constant 0 : i32
    %c0_i32_0 = arith.constant 0 : i32
    %c0_i32_1 = arith.constant 0 : i32
    return %c0_i32, %c0_i32_0 : i32, i32
  }
  func.func @transform_2(%arg0: i32, %arg1: i32) -> (i32, i32) {
    %c0_i32 = arith.constant 0 : i32
    %c0_i32_0 = arith.constant 0 : i32
    %c0_i32_1 = arith.constant 0 : i32
    return %c0_i32, %c0_i32_0 : i32, i32
  }
  func.func @transform_3(%arg0: i32, %arg1: i32) -> (i32, i32) {
    %c0_i32 = arith.constant 0 : i32
    %c0_i32_0 = arith.constant 0 : i32
    %c0_i32_1 = arith.constant 0 : i32
    return %c0_i32, %c0_i32_0 : i32, i32
  }
  func.func @transform_4(%arg0: i32, %arg1: i32) -> (i32, i32) {
    %c0_i32 = arith.constant 0 : i32
    %c0_i32_0 = arith.constant 0 : i32
    %c0_i32_1 = arith.constant 0 : i32
    return %c0_i32, %c0_i32_0 : i32, i32
  }
  func.func @transform_5(%arg0: i32, %arg1: i32) -> (i32, i32) {
    %c0_i32 = arith.constant 0 : i32
    %c0_i32_0 = arith.constant 0 : i32
    %c0_i32_1 = arith.constant 0 : i32
    return %c0_i32, %c0_i32_0 : i32, i32
  }
  func.func @transform_6(%arg0: i32, %arg1: i32) -> (i32, i32) {
    %c0_i32 = arith.constant 0 : i32
    %c0_i32_0 = arith.constant 0 : i32
    %c0_i32_1 = arith.constant 0 : i32
    return %c0_i32, %c0_i32_0 : i32, i32
  }
  func.func @transform_7(%arg0: i32, %arg1: i32) -> (i32, i32) {
    %c0_i32 = arith.constant 0 : i32
    %c0_i32_0 = arith.constant 0 : i32
    return %c0_i32, %arg1 : i32, i32
  }
  func.func @transform_8(%arg0: i32, %arg1: i32) -> (i32, i32) {
    %c0_i32 = arith.constant 0 : i32
    %c0_i32_0 = arith.constant 0 : i32
    return %c0_i32, %arg1 : i32, i32
  }
  func.func @transform_9(%arg0: i32, %arg1: i32) -> (i32, i32) {
    %c0_i32 = arith.constant 0 : i32
    return %arg0, %arg1 : i32, i32
  }
}

</mosaic_0001>

<llo_original>
// kernel: tpu_custom_call.1
$region0: #{tpu_custom_call.1}
  #allocation0 [shape = 'u32[]', space=smem, size = 0x4, offset = 0x4, fixed_abs, tag = 'smem constant byte address 0x4 - core index']
  #allocation1 [shape = 'u32[144,128]{1,0:T(1,128)}', space=vmem, size = 0x12000, scoped, tag = 'internal scratch']
  %s0 = inlined_call_operand.vmem [shape: f32[24,16], index: 0, kind: input, shape index: {}]
  %s1 = inlined_call_operand.vmem [shape: bf16[16,128], index: 1, kind: input, shape index: {}]
  %s2 = inlined_call_operand.vmem [shape: f32[1,128], index: 2, kind: input, shape index: {}]
  %s3 = inlined_call_operand.hbm [shape: bf16[128,128], index: 3, kind: input, shape index: {}]
  %s4 = inlined_call_operand.vmem [shape: f32[1,128], index: 4, kind: input, shape index: {}]
  %s5 = inlined_call_operand.hbm [shape: bf16[128,256], index: 5, kind: input, shape index: {}]
  %s6 = inlined_call_operand.vmem [shape: f32[1,256], index: 6, kind: input, shape index: {}]
  %s7 = inlined_call_operand.hbm [shape: bf16[256,384], index: 7, kind: input, shape index: {}]
  %s8 = inlined_call_operand.vmem [shape: f32[1,384], index: 8, kind: input, shape index: {}]
  %s9 = inlined_call_operand.hbm [shape: f32[24,384], index: 9, kind: output, shape index: {}]
  %s10 = sld [smem:[#allocation0]]
  $region58: #{tpu_custom_call.1} parent=0
    _
  %s12 = ssub.s32 1, %s10
  %s13 = scalar_select 0, %s12, %s10
  $region1: #{tpu_custom_call.1} parent=0
    #allocation2 [shape = 'u8[32768]{0}', space=vmem, size = 0x8000, scoped, tag = 'input window, operand 3, single buffered']
    #allocation3 [shape = 's32[1]{0}', space=sflag, size = 0x4, scoped, tag = 'scoped memory for tpu_custom_call.1']
    #allocation4 [shape = 's32[1]{0}', space=sflag, size = 0x4, scoped, tag = 'scoped memory for tpu_custom_call.1']
    #allocation5 [shape = 'u8[65536]{0}', space=vmem, size = 0x10000, scoped, tag = 'input window, operand 5, single buffered']
    #allocation6 [shape = 's32[1]{0}', space=sflag, size = 0x4, scoped, tag = 'scoped memory for tpu_custom_call.1']
    #allocation7 [shape = 'u8[196608]{0}', space=vmem, size = 0x30000, scoped, tag = 'input window, operand 7, single buffered']
    #allocation8 [shape = 'u8[36864]{0}', space=vmem, size = 0x9000, scoped, tag = 'output window, operand 0, single buffered']
    %14 = vsyncpa [#allocation3], 0
    %15 = vsyncpa [#allocation6], 0
    %16 = vsyncpa [#allocation4], 0
    // Predicated region
    $region2: #{tpu_custom_call.1} parent=1 // pred_check
      _
    $region3: #{tpu_custom_call.1} parent=1 // pred_check_branch
      %18 = sbr.rel (0) target = $region5
    $region4: #{tpu_custom_call.1} parent=1 // pred_region
      _
    $region5: #{tpu_custom_call.1} parent=1 // pred_fallthru
      _
    // Predicated region
    $region6: #{tpu_custom_call.1} parent=1 // pred_check
      _
    $region7: #{tpu_custom_call.1} parent=1 // pred_check_branch
      %20 = sbr.rel (0) target = $region9
    $region8: #{tpu_custom_call.1} parent=1 // pred_region
      _
    $region9: #{tpu_custom_call.1} parent=1 // pred_fallthru
      _
    // Predicated region
    $region10: #{tpu_custom_call.1} parent=1 // pred_check
      _
    $region11: #{tpu_custom_call.1} parent=1 // pred_check_branch
      %22 = sbr.rel (0) target = $region13
    $region12: #{tpu_custom_call.1} parent=1 // pred_region
      _
    $region13: #{tpu_custom_call.1} parent=1 // pred_fallthru
      _
    // Predicated region
    $region14: #{tpu_custom_call.1} parent=1 // pred_check
      _
    $region15: #{tpu_custom_call.1} parent=1 // pred_check_branch
      %24 = sbr.rel (0) target = $region17
    $region16: #{tpu_custom_call.1} parent=1 // pred_region
      %s26 = ssub.s32 1024, 1024
      %27 = vsyncadd [#allocation3], %s26
      %s28 = sshll.u32 [#allocation2], 4
      %s29 = int_to_ptr.vmem [resolvable:$true] %s28
      %34 = dma.hbm_to_vmem [thread:$0]  %s3, 1024, %s29, [#allocation3], 64, 64, 4
    $region17: #{tpu_custom_call.1} parent=1 // pred_fallthru
      _
    // Predicated region
    $region18: #{tpu_custom_call.1} parent=1 // pred_check
      _
    $region19: #{tpu_custom_call.1} parent=1 // pred_check_branch
      %36 = sbr.rel (0) target = $region21
    $region20: #{tpu_custom_call.1} parent=1 // pred_region
      _
    $region21: #{tpu_custom_call.1} parent=1 // pred_fallthru
      _
    // Predicated region
    $region22: #{tpu_custom_call.1} parent=1 // pred_check
      _
    $region23: #{tpu_custom_call.1} parent=1 // pred_check_branch
      %38 = sbr.rel (0) target = $region25
    $region24: #{tpu_custom_call.1} parent=1 // pred_region
      %s40 = ssub.s32 2048, 2048
      %41 = vsyncadd [#allocation6], %s40
      %s42 = sshll.u32 [#allocation5], 4
      %s43 = int_to_ptr.vmem [resolvable:$true] %s42
      %48 = dma.hbm_to_vmem [thread:$0]  %s5, 2048, %s43, [#allocation6], 128, 128, 8
    $region25: #{tpu_custom_call.1} parent=1 // pred_fallthru
      _
    // Predicated region
    $region26: #{tpu_custom_call.1} parent=1 // pred_check
      _
    $region27: #{tpu_custom_call.1} parent=1 // pred_check_branch
      %50 = sbr.rel (0) target = $region29
    $region28: #{tpu_custom_call.1} parent=1 // pred_region
      _
    $region29: #{tpu_custom_call.1} parent=1 // pred_fallthru
      _
    // Predicated region
    $region30: #{tpu_custom_call.1} parent=1 // pred_check
      _
    $region31: #{tpu_custom_call.1} parent=1 // pred_check_branch
      %52 = sbr.rel (0) target = $region33
    $region32: #{tpu_custom_call.1} parent=1 // pred_region
      %s54 = ssub.s32 6144, 6144
      %55 = vsyncadd [#allocation6], %s54
      %s56 = sshll.u32 [#allocation7], 4
      %s57 = int_to_ptr.vmem [resolvable:$true] %s56
      %62 = dma.hbm_to_vmem [thread:$0]  %s7, 6144, %s57, [#allocation6], 192, 192, 12
    $region33: #{tpu_custom_call.1} parent=1 // pred_fallthru
      _
    // Predicated region
    $region34: #{tpu_custom_call.1} parent=1 // pred_check
      _
    $region35: #{tpu_custom_call.1} parent=1 // pred_check_branch
      %64 = sbr.rel (0) target = $region37
    $region36: #{tpu_custom_call.1} parent=1 // pred_region
      _
    $region37: #{tpu_custom_call.1} parent=1 // pred_fallthru
      _
    // Predicated region
    $region38: #{tpu_custom_call.1} parent=1 // pred_check
      _
    $region39: #{tpu_custom_call.1} parent=1 // pred_check_branch
      %66 = sbr.rel (0) target = $region41
    $region40: #{tpu_custom_call.1} parent=1 // pred_region
      %67 = dma.done [#allocation3], 1024
    $region41: #{tpu_custom_call.1} parent=1 // pred_fallthru
      _
    // Predicated region
    $region42: #{tpu_custom_call.1} parent=1 // pred_check
      _
    $region43: #{tpu_custom_call.1} parent=1 // pred_check_branch
      %69 = sbr.rel (0) target = $region45
    $region44: #{tpu_custom_call.1} parent=1 // pred_region
      %70 = dma.done [#allocation6], 2048
    $region45: #{tpu_custom_call.1} parent=1 // pred_fallthru
      _
    // Predicated region
    $region46: #{tpu_custom_call.1} parent=1 // pred_check
      _
    $region47: #{tpu_custom_call.1} parent=1 // pred_check_branch
      %72 = sbr.rel (0) target = $region49
    $region48: #{tpu_custom_call.1} parent=1 // pred_region
      %73 = dma.done [#allocation6], 6144
    $region49: #{tpu_custom_call.1} parent=1 // pred_fallthru
      _
    %v75 = vld [vmem:[%s0] sm:$0xff]
    %v76 = vld [vmem:[%s0 + $0x8] sm:$0xff]
    %v77 = vld [vmem:[%s0 + $0x10] sm:$0xff]
    %v78 = vpack.c.bf16 %v76, %v75
    %v79 = vpack.c.bf16 %v77, %v77
    %v80 = vld [vmem:[%s1] sm:$0xf]
    %v81 = vld [vmem:[%s1 + $0x4] sm:$0xf]
    %v82 = vld [vmem:[%s2] sm:$0x1]
    %v84 = vlaneseq
    %v85 = vshrl.u32 %v84, 7
    %v86 = vsub.s32 0, %v85
    %v87 = vrot.slane %v82, %v86
    %v91 = vunpack.c.l.b16 %v80
    %v92 = vunpack.c.l.b16 %v81
    %v93 = vpack.c.b16 %v92, %v91
    %vm95 = vcmask 130048
    %v97 = vsel %vm95, %v78, 0
    %v100 = vsel %vm95, %v79, 0
    %102 = vmatprep.subr.bf16.mxu0 0
    %103 = vmatpush1.bf16.msra.mxu0 0
    %104 = vmatprep.subr.bf16.mxu0 0
    %105 = vmatpush1.bf16.msra.mxu0 0
    %106 = vmatprep.subr.bf16.mxu0 0
    %107 = vmatpush1.bf16.msra.mxu0 0
    %108 = vmatprep.subr.bf16.mxu0 0
    %109 = vmatpush1.bf16.msra.mxu0 0
    %110 = vmatprep.subr.bf16.mxu0 0
    %111 = vmatpush1.bf16.msra.mxu0 0
    %112 = vmatprep.subr.bf16.mxu0 0
    %113 = vmatpush1.bf16.msra.mxu0 0
    %114 = vmatprep.subr.bf16.mxu0 0
    %115 = vmatpush1.bf16.msra.mxu0 0
    %116 = vmatprep.subr.bf16.mxu0 0
    %117 = vmatpush1.bf16.msra.mxu0 %v93
    %118 = vmatprep.subr.bf16.mxu0 0
    %119 = vmatpush2.bf16.msra.mxu0 0
    %120 = vmatprep.subr.bf16.mxu0 0
    %121 = vmatpush2.bf16.msra.mxu0 0
    %122 = vmatprep.subr.bf16.mxu0 0
    %123 = vmatpush2.bf16.msra.mxu0 0
    %124 = vmatprep.subr.bf16.mxu0 0
    %125 = vmatpush2.bf16.msra.mxu0 0
    %126 = vmatprep.subr.bf16.mxu0 0
    %127 = vmatpush2.bf16.msra.mxu0 0
    %128 = vmatprep.subr.bf16.mxu0 0
    %129 = vmatpush2.bf16.msra.mxu0 0
    %130 = vmatprep.subr.bf16.mxu0 0
    %131 = vmatpush2.bf16.msra.mxu0 0
    %132 = vmatprep.subr.bf16.mxu0 0
    %133 = vmatpush2.bf16.msra.mxu0 0
    %134 = vmatprep.mubr.bf16.mxu0 0
    %135 = vmatmul.mubr.bf16.gmra.mxu0 %v97
    %v136 = vpop.f32.mrf.mxu0
    %v137 = vadd.f32 %v87, %v136
    %v138 = vpop.f32.mrf.mxu0
    %v139 = vpop.f32.mrf.mxu0
    %v140 = vadd.f32 %v87, %v139
    %v141 = vpop.f32.mrf.mxu0
    %142 = vmatprep.mubr.bf16.mxu0 0
    %143 = vmatmul.mubr.bf16.gmra.mxu0 %v100
    %v144 = vpop.f32.mrf.mxu0
    %v145 = vadd.f32 %v87, %v144
    %v146 = vpop.f32.mrf.mxu0
    %v147 = vpop.f32.mrf.mxu0
    %v148 = vpop.f32.mrf.mxu0
    %149 = vdwg.mxu0
    %vm150 = vcmp.gt.f32.partialorder %v137, 0.0
    %vm151 = vcmp.gt.f32.partialorder %v140, 0.0
    %vm152 = vcmp.gt.f32.partialorder %v145, 0.0
    %v153 = vmul.f32 %v137, 0.01
    %v154 = vmul.f32 %v140, 0.01
    %v155 = vmul.f32 %v145, 0.01
    %v156 = vsel %vm150, %v137, %v153
    %v157 = vsel %vm151, %v140, %v154
    %v158 = vsel %vm152, %v145, %v155
    %v159 = vpack.c.bf16 %v157, %v156
    %v160 = vpack.c.bf16 %v158, %v158
    %v161 = vld [vmem:[#allocation2] sm:$0xf]
    %v162 = vld [vmem:[#allocation2 + $0x4] sm:$0xf]
    %v163 = vld [vmem:[#allocation2 + $0x8] sm:$0xf]
    %v164 = vld [vmem:[#allocation2 + $0xc] sm:$0xf]
    %v165 = vld [vmem:[#allocation2 + $0x10] sm:$0xf]
    %v166 = vld [vmem:[#allocation2 + $0x14] sm:$0xf]
    %v167 = vld [vmem:[#allocation2 + $0x18] sm:$0xf]
    %v168 = vld [vmem:[#allocation2 + $0x1c] sm:$0xf]
    %v169 = vld [vmem:[#allocation2 + $0x20] sm:$0xf]
    %v170 = vld [vmem:[#allocation2 + $0x24] sm:$0xf]
    %v171 = vld [vmem:[#allocation2 + $0x28] sm:$0xf]
    %v172 = vld [vmem:[#allocation2 + $0x2c] sm:$0xf]
    %v173 = vld [vmem:[#allocation2 + $0x30] sm:$0xf]
    %v174 = vld [vmem:[#allocation2 + $0x34] sm:$0xf]
    %v175 = vld [vmem:[#allocation2 + $0x38] sm:$0xf]
    %v176 = vld [vmem:[#allocation2 + $0x3c] sm:$0xf]
    %v177 = vld [vmem:[%s4] sm:$0x1]
    %v179 = vlaneseq
    %v180 = vshrl.u32 %v179, 7
    %v181 = vsub.s32 0, %v180
    %v182 = vrot.slane %v177, %v181
    %v200 = vunpack.c.l.b16 %v161
    %v201 = vunpack.c.l.b16 %v162
    %v202 = vunpack.c.l.b16 %v163
    %v203 = vunpack.c.l.b16 %v164
    %v204 = vunpack.c.l.b16 %v165
    %v205 = vunpack.c.l.b16 %v166
    %v206 = vunpack.c.l.b16 %v167
    %v207 = vunpack.c.l.b16 %v168
    %v208 = vunpack.c.l.b16 %v169
    %v209 = vunpack.c.l.b16 %v170
    %v210 = vunpack.c.l.b16 %v171
    %v211 = vunpack.c.l.b16 %v172
    %v212 = vunpack.c.l.b16 %v173
    %v213 = vunpack.c.l.b16 %v174
    %v214 = vunpack.c.l.b16 %v175
    %v215 = vunpack.c.l.b16 %v176
    %v216 = vpack.c.b16 %v201, %v200
    %v217 = vpack.c.b16 %v203, %v202
    %v218 = vpack.c.b16 %v205, %v204
    %v219 = vpack.c.b16 %v207, %v206
    %v220 = vpack.c.b16 %v209, %v208
    %v221 = vpack.c.b16 %v211, %v210
    %v222 = vpack.c.b16 %v213, %v212
    %v223 = vpack.c.b16 %v215, %v214
    %232 = vmatprep.subr.bf16.mxu0 0
    %233 = vmatpush1.bf16.msra.mxu0 %v223
    %234 = vmatprep.subr.bf16.mxu0 0
    %235 = vmatpush1.bf16.msra.mxu0 %v222
    %236 = vmatprep.subr.bf16.mxu0 0
    %237 = vmatpush1.bf16.msra.mxu0 %v221
    %238 = vmatprep.subr.bf16.mxu0 0
    %239 = vmatpush1.bf16.msra.mxu0 %v220
    %240 = vmatprep.subr.bf16.mxu0 0
    %241 = vmatpush1.bf16.msra.mxu0 %v219
    %242 = vmatprep.subr.bf16.mxu0 0
    %243 = vmatpush1.bf16.msra.mxu0 %v218
    %244 = vmatprep.subr.bf16.mxu0 0
    %245 = vmatpush1.bf16.msra.mxu0 %v217
    %246 = vmatprep.subr.bf16.mxu0 0
    %247 = vmatpush1.bf16.msra.mxu0 %v216
    %248 = vmatprep.subr.bf16.mxu0 0
    %249 = vmatpush2.bf16.msra.mxu0 0
    %250 = vmatprep.subr.bf16.mxu0 0
    %251 = vmatpush2.bf16.msra.mxu0 0
    %252 = vmatprep.subr.bf16.mxu0 0
    %253 = vmatpush2.bf16.msra.mxu0 0
    %254 = vmatprep.subr.bf16.mxu0 0
    %255 = vmatpush2.bf16.msra.mxu0 0
    %256 = vmatprep.subr.bf16.mxu0 0
    %257 = vmatpush2.bf16.msra.mxu0 0
    %258 = vmatprep.subr.bf16.mxu0 0
    %259 = vmatpush2.bf16.msra.mxu0 0
    %260 = vmatprep.subr.bf16.mxu0 0
    %261 = vmatpush2.bf16.msra.mxu0 0
    %262 = vmatprep.subr.bf16.mxu0 0
    %263 = vmatpush2.bf16.msra.mxu0 0
    %264 = vmatprep.mubr.bf16.mxu0 0
    %265 = vmatmul.mubr.bf16.gmra.mxu0 %v159
    %v266 = vpop.f32.mrf.mxu0
    %v267 = vadd.f32 %v182, %v266
    %v268 = vpop.f32.mrf.mxu0
    %v269 = vpop.f32.mrf.mxu0
    %v270 = vadd.f32 %v182, %v269
    %v271 = vpop.f32.mrf.mxu0
    %272 = vmatprep.mubr.bf16.mxu0 0
    %273 = vmatmul.mubr.bf16.gmra.mxu0 %v160
    %v274 = vpop.f32.mrf.mxu0
    %v275 = vadd.f32 %v182, %v274
    %v276 = vpop.f32.mrf.mxu0
    %v277 = vpop.f32.mrf.mxu0
    %v278 = vpop.f32.mrf.mxu0
    %279 = vdwg.mxu0
    %vm280 = vcmp.gt.f32.partialorder %v267, 0.0
    %vm281 = vcmp.gt.f32.partialorder %v270, 0.0
    %vm282 = vcmp.gt.f32.partialorder %v275, 0.0
    %v283 = vmul.f32 %v267, 0.01
    %v284 = vmul.f32 %v270, 0.01
    %v285 = vmul.f32 %v275, 0.01
    %v286 = vsel %vm280, %v267, %v283
    %v287 = vsel %vm281, %v270, %v284
    %v288 = vsel %vm282, %v275, %v285
    %v289 = vpack.c.bf16 %v287, %v286
    %v290 = vpack.c.bf16 %v288, %v288
    %v291 = vld [vmem:[#allocation5] sm:$0xff]
    %v292 = vld [vmem:[#allocation5 + $0x8] sm:$0xff]
    %v293 = vld [vmem:[#allocation5 + $0x10] sm:$0xff]
    %v294 = vld [vmem:[#allocation5 + $0x18] sm:$0xff]
    %v295 = vld [vmem:[#allocation5 + $0x20] sm:$0xff]
    %v296 = vld [vmem:[#allocation5 + $0x28] sm:$0xff]
    %v297 = vld [vmem:[#allocation5 + $0x30] sm:$0xff]
    %v298 = vld [vmem:[#allocation5 + $0x38] sm:$0xff]
    %v299 = vld [vmem:[#allocation5 + $0x40] sm:$0xff]
    %v300 = vld [vmem:[#allocation5 + $0x48] sm:$0xff]
    %v301 = vld [vmem:[#allocation5 + $0x50] sm:$0xff]
    %v302 = vld [vmem:[#allocation5 + $0x58] sm:$0xff]
    %v303 = vld [vmem:[#allocation5 + $0x60] sm:$0xff]
    %v304 = vld [vmem:[#allocation5 + $0x68] sm:$0xff]
    %v305 = vld [vmem:[#allocation5 + $0x70] sm:$0xff]
    %v306 = vld [vmem:[#allocation5 + $0x78] sm:$0xff]
    %v307 = vld [vmem:[%s6] sm:$0x3]
    %v309 = vlaneseq
    %v310 = vshrl.u32 %v309, 7
    %v311 = vsub.s32 0, %v310
    %v312 = vrot.slane %v307, %v311
    %v313 = vlaneseq
    %v314 = vshrl.u32 %v313, 7
    %v315 = vsub.s32 1, %v314
    %v316 = vrot.slane %v307, %v315
    %v335 = vunpack.c.l.b16 %v291
    %v336 = vunpack.c.h.b16 %v291
    %v337 = vunpack.c.l.b16 %v292
    %v338 = vunpack.c.h.b16 %v292
    %v339 = vunpack.c.l.b16 %v293
    %v340 = vunpack.c.h.b16 %v293
    %v341 = vunpack.c.l.b16 %v294
    %v342 = vunpack.c.h.b16 %v294
    %v343 = vunpack.c.l.b16 %v295
    %v344 = vunpack.c.h.b16 %v295
    %v345 = vunpack.c.l.b16 %v296
    %v346 = vunpack.c.h.b16 %v296
    %v347 = vunpack.c.l.b16 %v297
    %v348 = vunpack.c.h.b16 %v297
    %v349 = vunpack.c.l.b16 %v298
    %v350 = vunpack.c.h.b16 %v298
    %v351 = vunpack.c.l.b16 %v299
    %v352 = vunpack.c.h.b16 %v299
    %v353 = vunpack.c.l.b16 %v300
    %v354 = vunpack.c.h.b16 %v300
    %v355 = vunpack.c.l.b16 %v301
    %v356 = vunpack.c.h.b16 %v301
    %v357 = vunpack.c.l.b16 %v302
    %v358 = vunpack.c.h.b16 %v302
    %v359 = vunpack.c.l.b16 %v303
    %v360 = vunpack.c.h.b16 %v303
    %v361 = vunpack.c.l.b16 %v304
    %v362 = vunpack.c.h.b16 %v304
    %v363 = vunpack.c.l.b16 %v305
    %v364 = vunpack.c.h.b16 %v305
    %v365 = vunpack.c.l.b16 %v306
    %v366 = vunpack.c.h.b16 %v306
    %v367 = vpack.c.b16 %v337, %v335
    %v368 = vpack.c.b16 %v338, %v336
    %v369 = vpack.c.b16 %v341, %v339
    %v370 = vpack.c.b16 %v342, %v340
    %v371 = vpack.c.b16 %v345, %v343
    %v372 = vpack.c.b16 %v346, %v344
    %v373 = vpack.c.b16 %v349, %v347
    %v374 = vpack.c.b16 %v350, %v348
    %v375 = vpack.c.b16 %v353, %v351
    %v376 = vpack.c.b16 %v354, %v352
    %v377 = vpack.c.b16 %v357, %v355
    %v378 = vpack.c.b16 %v358, %v356
    %v379 = vpack.c.b16 %v361, %v359
    %v380 = vpack.c.b16 %v362, %v360
    %v381 = vpack.c.b16 %v365, %v363
    %v382 = vpack.c.b16 %v366, %v364
    %399 = vmatprep.subr.bf16.mxu0 %v382
    %400 = vmatpush1.bf16.msra.mxu0 %v381
    %401 = vmatprep.subr.bf16.mxu0 %v380
    %402 = vmatpush1.bf16.msra.mxu0 %v379
    %403 = vmatprep.subr.bf16.mxu0 %v378
    %404 = vmatpush1.bf16.msra.mxu0 %v377
    %405 = vmatprep.subr.bf16.mxu0 %v376
    %406 = vmatpush1.bf16.msra.mxu0 %v375
    %407 = vmatprep.subr.bf16.mxu0 %v374
    %408 = vmatpush1.bf16.msra.mxu0 %v373
    %409 = vmatprep.subr.bf16.mxu0 %v372
    %410 = vmatpush1.bf16.msra.mxu0 %v371
    %411 = vmatprep.subr.bf16.mxu0 %v370
    %412 = vmatpush1.bf16.msra.mxu0 %v369
    %413 = vmatprep.subr.bf16.mxu0 %v368
    %414 = vmatpush1.bf16.msra.mxu0 %v367
    %415 = vmatprep.subr.bf16.mxu0 0
    %416 = vmatpush2.bf16.msra.mxu0 0
    %417 = vmatprep.subr.bf16.mxu0 0
    %418 = vmatpush2.bf16.msra.mxu0 0
    %419 = vmatprep.subr.bf16.mxu0 0
    %420 = vmatpush2.bf16.msra.mxu0 0
    %421 = vmatprep.subr.bf16.mxu0 0
    %422 = vmatpush2.bf16.msra.mxu0 0
    %423 = vmatprep.subr.bf16.mxu0 0
    %424 = vmatpush2.bf16.msra.mxu0 0
    %425 = vmatprep.subr.bf16.mxu0 0
    %426 = vmatpush2.bf16.msra.mxu0 0
    %427 = vmatprep.subr.bf16.mxu0 0
    %428 = vmatpush2.bf16.msra.mxu0 0
    %429 = vmatprep.subr.bf16.mxu0 0
    %430 = vmatpush2.bf16.msra.mxu0 0
    %431 = vmatprep.mubr.bf16.mxu0 0
    %432 = vmatmul.mubr.bf16.gmra.mxu0 %v289
    %v433 = vpop.f32.mrf.mxu0
    %v434 = vadd.f32 %v312, %v433
    %v435 = vpop.f32.mrf.mxu0
    %v436 = vadd.f32 %v316, %v435
    %v437 = vpop.f32.mrf.mxu0
    %v438 = vadd.f32 %v312, %v437
    %v439 = vpop.f32.mrf.mxu0
    %v440 = vadd.f32 %v316, %v439
    %441 = vmatprep.mubr.bf16.mxu0 0
    %442 = vmatmul.mubr.bf16.gmra.mxu0 %v290
    %v443 = vpop.f32.mrf.mxu0
    %v444 = vadd.f32 %v312, %v443
    %v445 = vpop.f32.mrf.mxu0
    %v446 = vadd.f32 %v316, %v445
    %v447 = vpop.f32.mrf.mxu0
    %v448 = vpop.f32.mrf.mxu0
    %449 = vdwg.mxu0
    %vm450 = vcmp.gt.f32.partialorder %v434, 0.0
    %vm451 = vcmp.gt.f32.partialorder %v436, 0.0
    %vm452 = vcmp.gt.f32.partialorder %v438, 0.0
    %vm453 = vcmp.gt.f32.partialorder %v440, 0.0
    %vm454 = vcmp.gt.f32.partialorder %v444, 0.0
    %vm455 = vcmp.gt.f32.partialorder %v446, 0.0
    %v456 = vmul.f32 %v434, 0.01
    %v457 = vmul.f32 %v436, 0.01
    %v458 = vmul.f32 %v438, 0.01
    %v459 = vmul.f32 %v440, 0.01
    %v460 = vmul.f32 %v444, 0.01
    %v461 = vmul.f32 %v446, 0.01
    %v462 = vsel %vm450, %v434, %v456
    %v463 = vsel %vm451, %v436, %v457
    %v464 = vsel %vm452, %v438, %v458
    %v465 = vsel %vm453, %v440, %v459
    %v466 = vsel %vm454, %v444, %v460
    %v467 = vsel %vm455, %v446, %v461
    %v468 = vpack.c.bf16 %v464, %v462
    %v469 = vpack.c.bf16 %v465, %v463
    %v470 = vpack.c.bf16 %v466, %v466
    %v471 = vpack.c.bf16 %v467, %v467
    %v472 = vld [vmem:[#allocation7] sm:$0xff]
    %v473 = vld [vmem:[#allocation7 + $0x8] sm:$0xf]
    %v474 = vld [vmem:[#allocation7 + $0xc] sm:$0xff]
    %v475 = vld [vmem:[#allocation7 + $0x14] sm:$0xf]
    %v476 = vld [vmem:[#allocation7 + $0x18] sm:$0xff]
    %v477 = vld [vmem:[#allocation7 + $0x20] sm:$0xf]
    %v478 = vld [vmem:[#allocation7 + $0x24] sm:$0xff]
    %v479 = vld [vmem:[#allocation7 + $0x2c] sm:$0xf]
    %v480 = vld [vmem:[#allocation7 + $0x30] sm:$0xff]
    %v481 = vld [vmem:[#allocation7 + $0x38] sm:$0xf]
    %v482 = vld [vmem:[#allocation7 + $0x3c] sm:$0xff]
    %v483 = vld [vmem:[#allocation7 + $0x44] sm:$0xf]
    %v484 = vld [vmem:[#allocation7 + $0x48] sm:$0xff]
    %v485 = vld [vmem:[#allocation7 + $0x50] sm:$0xf]
    %v486 = vld [vmem:[#allocation7 + $0x54] sm:$0xff]
    %v487 = vld [vmem:[#allocation7 + $0x5c] sm:$0xf]
    %v488 = vld [vmem:[#allocation7 + $0x60] sm:$0xff]
    %v489 = vld [vmem:[#allocation7 + $0x68] sm:$0xf]
    %v490 = vld [vmem:[#allocation7 + $0x6c] sm:$0xff]
    %v491 = vld [vmem:[#allocation7 + $0x74] sm:$0xf]
    %v492 = vld [vmem:[#allocation7 + $0x78] sm:$0xff]
    %v493 = vld [vmem:[#allocation7 + $0x80] sm:$0xf]
    %v494 = vld [vmem:[#allocation7 + $0x84] sm:$0xff]
    %v495 = vld [vmem:[#allocation7 + $0x8c] sm:$0xf]
    %v496 = vld [vmem:[#allocation7 + $0x90] sm:$0xff]
    %v497 = vld [vmem:[#allocation7 + $0x98] sm:$0xf]
    %v498 = vld [vmem:[#allocation7 + $0x9c] sm:$0xff]
    %v499 = vld [vmem:[#allocation7 + $0xa4] sm:$0xf]
    %v500 = vld [vmem:[#allocation7 + $0xa8] sm:$0xff]
    %v501 = vld [vmem:[#allocation7 + $0xb0] sm:$0xf]
    %v502 = vld [vmem:[#allocation7 + $0xb4] sm:$0xff]
    %v503 = vld [vmem:[#allocation7 + $0xbc] sm:$0xf]
    %v504 = vld [vmem:[#allocation7 + $0xc0] sm:$0xff]
    %v505 = vld [vmem:[#allocation7 + $0xc8] sm:$0xf]
    %v506 = vld [vmem:[#allocation7 + $0xcc] sm:$0xff]
    %v507 = vld [vmem:[#allocation7 + $0xd4] sm:$0xf]
    %v508 = vld [vmem:[#allocation7 + $0xd8] sm:$0xff]
    %v509 = vld [vmem:[#allocation7 + $0xe0] sm:$0xf]
    %v510 = vld [vmem:[#allocation7 + $0xe4] sm:$0xff]
    %v511 = vld [vmem:[#allocation7 + $0xec] sm:$0xf]
    %v512 = vld [vmem:[#allocation7 + $0xf0] sm:$0xff]
    %v513 = vld [vmem:[#allocation7 + $0xf8] sm:$0xf]
    %v514 = vld [vmem:[#allocation7 + $0xfc] sm:$0xff]
    %v515 = vld [vmem:[#allocation7 + $0x104] sm:$0xf]
    %v516 = vld [vmem:[#allocation7 + $0x108] sm:$0xff]
    %v517 = vld [vmem:[#allocation7 + $0x110] sm:$0xf]
    %v518 = vld [vmem:[#allocation7 + $0x114] sm:$0xff]
    %v519 = vld [vmem:[#allocation7 + $0x11c] sm:$0xf]
    %v520 = vld [vmem:[#allocation7 + $0x120] sm:$0xff]
    %v521 = vld [vmem:[#allocation7 + $0x128] sm:$0xf]
    %v522 = vld [vmem:[#allocation7 + $0x12c] sm:$0xff]
    %v523 = vld [vmem:[#allocation7 + $0x134] sm:$0xf]
    %v524 = vld [vmem:[#allocation7 + $0x138] sm:$0xff]
    %v525 = vld [vmem:[#allocation7 + $0x140] sm:$0xf]
    %v526 = vld [vmem:[#allocation7 + $0x144] sm:$0xff]
    %v527 = vld [vmem:[#allocation7 + $0x14c] sm:$0xf]
    %v528 = vld [vmem:[#allocation7 + $0x150] sm:$0xff]
    %v529 = vld [vmem:[#allocation7 + $0x158] sm:$0xf]
    %v530 = vld [vmem:[#allocation7 + $0x15c] sm:$0xff]
    %v531 = vld [vmem:[#allocation7 + $0x164] sm:$0xf]
    %v532 = vld [vmem:[#allocation7 + $0x168] sm:$0xff]
    %v533 = vld [vmem:[#allocation7 + $0x170] sm:$0xf]
    %v534 = vld [vmem:[#allocation7 + $0x174] sm:$0xff]
    %v535 = vld [vmem:[#allocation7 + $0x17c] sm:$0xf]
    %v536 = vld [vmem:[%s8] sm:$0x7]
    %v538 = vlaneseq
    %v539 = vshrl.u32 %v538, 7
    %v540 = vsub.s32 0, %v539
    %v541 = vrot.slane %v536, %v540
    %v542 = vlaneseq
    %v543 = vshrl.u32 %v542, 7
    %v544 = vsub.s32 1, %v543
    %v545 = vrot.slane %v536, %v544
    %v546 = vlaneseq
    %v547 = vshrl.u32 %v546, 7
    %v548 = vsub.s32 2, %v547
    %v549 = vrot.slane %v536, %v548
    %v617 = vunpack.c.l.b16 %v472
    %v618 = vunpack.c.h.b16 %v472
    %v619 = vunpack.c.l.b16 %v473
    %v620 = vunpack.c.l.b16 %v474
    %v621 = vunpack.c.h.b16 %v474
    %v622 = vunpack.c.l.b16 %v475
    %v623 = vunpack.c.l.b16 %v476
    %v624 = vunpack.c.h.b16 %v476
    %v625 = vunpack.c.l.b16 %v477
    %v626 = vunpack.c.l.b16 %v478
    %v627 = vunpack.c.h.b16 %v478
    %v628 = vunpack.c.l.b16 %v479
    %v629 = vunpack.c.l.b16 %v480
    %v630 = vunpack.c.h.b16 %v480
    %v631 = vunpack.c.l.b16 %v481
    %v632 = vunpack.c.l.b16 %v482
    %v633 = vunpack.c.h.b16 %v482
    %v634 = vunpack.c.l.b16 %v483
    %v635 = vunpack.c.l.b16 %v484
    %v636 = vunpack.c.h.b16 %v484
    %v637 = vunpack.c.l.b16 %v485
    %v638 = vunpack.c.l.b16 %v486
    %v639 = vunpack.c.h.b16 %v486
    %v640 = vunpack.c.l.b16 %v487
    %v641 = vunpack.c.l.b16 %v488
    %v642 = vunpack.c.h.b16 %v488
    %v643 = vunpack.c.l.b16 %v489
    %v644 = vunpack.c.l.b16 %v490
    %v645 = vunpack.c.h.b16 %v490
    %v646 = vunpack.c.l.b16 %v491
    %v647 = vunpack.c.l.b16 %v492
    %v648 = vunpack.c.h.b16 %v492
    %v649 = vunpack.c.l.b16 %v493
    %v650 = vunpack.c.l.b16 %v494
    %v651 = vunpack.c.h.b16 %v494
    %v652 = vunpack.c.l.b16 %v495
    %v653 = vunpack.c.l.b16 %v496
    %v654 = vunpack.c.h.b16 %v496
    %v655 = vunpack.c.l.b16 %v497
    %v656 = vunpack.c.l.b16 %v498
    %v657 = vunpack.c.h.b16 %v498
    %v658 = vunpack.c.l.b16 %v499
    %v659 = vunpack.c.l.b16 %v500
    %v660 = vunpack.c.h.b16 %v500
    %v661 = vunpack.c.l.b16 %v501
    %v662 = vunpack.c.l.b16 %v502
    %v663 = vunpack.c.h.b16 %v502
    %v664 = vunpack.c.l.b16 %v503
    %v665 = vunpack.c.l.b16 %v504
    %v666 = vunpack.c.h.b16 %v504
    %v667 = vunpack.c.l.b16 %v505
    %v668 = vunpack.c.l.b16 %v506
    %v669 = vunpack.c.h.b16 %v506
    %v670 = vunpack.c.l.b16 %v507
    %v671 = vunpack.c.l.b16 %v508
    %v672 = vunpack.c.h.b16 %v508
    %v673 = vunpack.c.l.b16 %v509
    %v674 = vunpack.c.l.b16 %v510
    %v675 = vunpack.c.h.b16 %v510
    %v676 = vunpack.c.l.b16 %v511
    %v677 = vunpack.c.l.b16 %v512
    %v678 = vunpack.c.h.b16 %v512
    %v679 = vunpack.c.l.b16 %v513
    %v680 = vunpack.c.l.b16 %v514
    %v681 = vunpack.c.h.b16 %v514
    %v682 = vunpack.c.l.b16 %v515
    %v683 = vunpack.c.l.b16 %v516
    %v684 = vunpack.c.h.b16 %v516
    %v685 = vunpack.c.l.b16 %v517
    %v686 = vunpack.c.l.b16 %v518
    %v687 = vunpack.c.h.b16 %v518
    %v688 = vunpack.c.l.b16 %v519
    %v689 = vunpack.c.l.b16 %v520
    %v690 = vunpack.c.h.b16 %v520
    %v691 = vunpack.c.l.b16 %v521
    %v692 = vunpack.c.l.b16 %v522
    %v693 = vunpack.c.h.b16 %v522
    %v694 = vunpack.c.l.b16 %v523
    %v695 = vunpack.c.l.b16 %v524
    %v696 = vunpack.c.h.b16 %v524
    %v697 = vunpack.c.l.b16 %v525
    %v698 = vunpack.c.l.b16 %v526
    %v699 = vunpack.c.h.b16 %v526
    %v700 = vunpack.c.l.b16 %v527
    %v701 = vunpack.c.l.b16 %v528
    %v702 = vunpack.c.h.b16 %v528
    %v703 = vunpack.c.l.b16 %v529
    %v704 = vunpack.c.l.b16 %v530
    %v705 = vunpack.c.h.b16 %v530
    %v706 = vunpack.c.l.b16 %v531
    %v707 = vunpack.c.l.b16 %v532
    %v708 = vunpack.c.h.b16 %v532
    %v709 = vunpack.c.l.b16 %v533
    %v710 = vunpack.c.l.b16 %v534
    %v711 = vunpack.c.h.b16 %v534
    %v712 = vunpack.c.l.b16 %v535
    %v713 = vpack.c.b16 %v620, %v617
    %v714 = vpack.c.b16 %v621, %v618
    %v715 = vpack.c.b16 %v622, %v619
    %v716 = vpack.c.b16 %v626, %v623
    %v717 = vpack.c.b16 %v627, %v624
    %v718 = vpack.c.b16 %v628, %v625
    %v719 = vpack.c.b16 %v632, %v629
    %v720 = vpack.c.b16 %v633, %v630
    %v721 = vpack.c.b16 %v634, %v631
    %v722 = vpack.c.b16 %v638, %v635
    %v723 = vpack.c.b16 %v639, %v636
    %v724 = vpack.c.b16 %v640, %v637
    %v725 = vpack.c.b16 %v644, %v641
    %v726 = vpack.c.b16 %v645, %v642
    %v727 = vpack.c.b16 %v646, %v643
    %v728 = vpack.c.b16 %v650, %v647
    %v729 = vpack.c.b16 %v651, %v648
    %v730 = vpack.c.b16 %v652, %v649
    %v731 = vpack.c.b16 %v656, %v653
    %v732 = vpack.c.b16 %v657, %v654
    %v733 = vpack.c.b16 %v658, %v655
    %v734 = vpack.c.b16 %v662, %v659
    %v735 = vpack.c.b16 %v663, %v660
    %v736 = vpack.c.b16 %v664, %v661
    %v737 = vpack.c.b16 %v668, %v665
    %v738 = vpack.c.b16 %v669, %v666
    %v739 = vpack.c.b16 %v670, %v667
    %v740 = vpack.c.b16 %v674, %v671
    %v741 = vpack.c.b16 %v675, %v672
    %v742 = vpack.c.b16 %v676, %v673
    %v743 = vpack.c.b16 %v680, %v677
    %v744 = vpack.c.b16 %v681, %v678
    %v745 = vpack.c.b16 %v682, %v679
    %v746 = vpack.c.b16 %v686, %v683
    %v747 = vpack.c.b16 %v687, %v684
    %v748 = vpack.c.b16 %v688, %v685
    %v749 = vpack.c.b16 %v692, %v689
    %v750 = vpack.c.b16 %v693, %v690
    %v751 = vpack.c.b16 %v694, %v691
    %v752 = vpack.c.b16 %v698, %v695
    %v753 = vpack.c.b16 %v699, %v696
    %v754 = vpack.c.b16 %v700, %v697
    %v755 = vpack.c.b16 %v704, %v701
    %v756 = vpack.c.b16 %v705, %v702
    %v757 = vpack.c.b16 %v706, %v703
    %v758 = vpack.c.b16 %v710, %v707
    %v759 = vpack.c.b16 %v711, %v708
    %v760 = vpack.c.b16 %v712, %v709
    %809 = vmatprep.subr.bf16.mxu0 %v735
    %810 = vmatpush1.bf16.msra.mxu0 %v734
    %811 = vmatprep.subr.bf16.mxu0 %v732
    %812 = vmatpush1.bf16.msra.mxu0 %v731
    %813 = vmatprep.subr.bf16.mxu0 %v729
    %814 = vmatpush1.bf16.msra.mxu0 %v728
    %815 = vmatprep.subr.bf16.mxu0 %v726
    %816 = vmatpush1.bf16.msra.mxu0 %v725
    %817 = vmatprep.subr.bf16.mxu0 %v723
    %818 = vmatpush1.bf16.msra.mxu0 %v722
    %819 = vmatprep.subr.bf16.mxu0 %v720
    %820 = vmatpush1.bf16.msra.mxu0 %v719
    %821 = vmatprep.subr.bf16.mxu0 %v717
    %822 = vmatpush1.bf16.msra.mxu0 %v716
    %823 = vmatprep.subr.bf16.mxu0 %v714
    %824 = vmatpush1.bf16.msra.mxu0 %v713
    %825 = vmatprep.subr.bf16.mxu0 %v759
    %826 = vmatpush2.bf16.msra.mxu0 %v758
    %827 = vmatprep.subr.bf16.mxu0 %v756
    %828 = vmatpush2.bf16.msra.mxu0 %v755
    %829 = vmatprep.subr.bf16.mxu0 %v753
    %830 = vmatpush2.bf16.msra.mxu0 %v752
    %831 = vmatprep.subr.bf16.mxu0 %v750
    %832 = vmatpush2.bf16.msra.mxu0 %v749
    %833 = vmatprep.subr.bf16.mxu0 %v747
    %834 = vmatpush2.bf16.msra.mxu0 %v746
    %835 = vmatprep.subr.bf16.mxu0 %v744
    %836 = vmatpush2.bf16.msra.mxu0 %v743
    %837 = vmatprep.subr.bf16.mxu0 %v741
    %838 = vmatpush2.bf16.msra.mxu0 %v740
    %839 = vmatprep.subr.bf16.mxu0 %v738
    %840 = vmatpush2.bf16.msra.mxu0 %v737
    %841 = vmatprep.mubr.bf16.mxu0 %v469
    %842 = vmatmul.mubr.bf16.gmra.mxu0 %v468
    %v843 = vpop.f32.mrf.mxu0
    %v844 = vadd.f32 %v541, %v843
    %v845 = vpop.f32.mrf.mxu0
    %v846 = vadd.f32 %v545, %v845
    %v847 = vpop.f32.mrf.mxu0
    %v848 = vadd.f32 %v541, %v847
    %v849 = vpop.f32.mrf.mxu0
    %v850 = vadd.f32 %v545, %v849
    %851 = vmatprep.mubr.bf16.mxu0 %v471
    %852 = vmatmul.mubr.bf16.gmra.mxu0 %v470
    %v853 = vpop.f32.mrf.mxu0
    %v854 = vadd.f32 %v541, %v853
    %v855 = vpop.f32.mrf.mxu0
    %v856 = vadd.f32 %v545, %v855
    %v857 = vpop.f32.mrf.mxu0
    %v858 = vpop.f32.mrf.mxu0
    %859 = vdwg.mxu0
    %860 = vmatprep.subr.bf16.mxu0 0
    %861 = vmatpush1.bf16.msra.mxu0 %v736
    %862 = vmatprep.subr.bf16.mxu0 0
    %863 = vmatpush1.bf16.msra.mxu0 %v733
    %864 = vmatprep.subr.bf16.mxu0 0
    %865 = vmatpush1.bf16.msra.mxu0 %v730
    %866 = vmatprep.subr.bf16.mxu0 0
    %867 = vmatpush1.bf16.msra.mxu0 %v727
    %868 = vmatprep.subr.bf16.mxu0 0
    %869 = vmatpush1.bf16.msra.mxu0 %v724
    %870 = vmatprep.subr.bf16.mxu0 0
    %871 = vmatpush1.bf16.msra.mxu0 %v721
    %872 = vmatprep.subr.bf16.mxu0 0
    %873 = vmatpush1.bf16.msra.mxu0 %v718
    %874 = vmatprep.subr.bf16.mxu0 0
    %875 = vmatpush1.bf16.msra.mxu0 %v715
    %876 = vmatprep.subr.bf16.mxu0 0
    %877 = vmatpush2.bf16.msra.mxu0 %v760
    %878 = vmatprep.subr.bf16.mxu0 0
    %879 = vmatpush2.bf16.msra.mxu0 %v757
    %880 = vmatprep.subr.bf16.mxu0 0
    %881 = vmatpush2.bf16.msra.mxu0 %v754
    %882 = vmatprep.subr.bf16.mxu0 0
    %883 = vmatpush2.bf16.msra.mxu0 %v751
    %884 = vmatprep.subr.bf16.mxu0 0
    %885 = vmatpush2.bf16.msra.mxu0 %v748
    %886 = vmatprep.subr.bf16.mxu0 0
    %887 = vmatpush2.bf16.msra.mxu0 %v745
    %888 = vmatprep.subr.bf16.mxu0 0
    %889 = vmatpush2.bf16.msra.mxu0 %v742
    %890 = vmatprep.subr.bf16.mxu0 0
    %891 = vmatpush2.bf16.msra.mxu0 %v739
    %892 = vmatprep.mubr.bf16.mxu0 %v469
    %893 = vmatmul.mubr.bf16.gmra.mxu0 %v468
    %v894 = vpop.f32.mrf.mxu0
    %v895 = vadd.f32 %v549, %v894
    %v896 = vpop.f32.mrf.mxu0
    %v897 = vpop.f32.mrf.mxu0
    %v898 = vadd.f32 %v549, %v897
    %v899 = vpop.f32.mrf.mxu0
    %900 = vmatprep.mubr.bf16.mxu0 %v471
    %901 = vmatmul.mubr.bf16.gmra.mxu0 %v470
    %v902 = vpop.f32.mrf.mxu0
    %v903 = vadd.f32 %v549, %v902
    %v904 = vpop.f32.mrf.mxu0
    %v905 = vpop.f32.mrf.mxu0
    %v906 = vpop.f32.mrf.mxu0
    %907 = vdwg.mxu0
    %v908 = vmax.f32 %v844, 0.0
    %v909 = vmax.f32 %v846, 0.0
    %v910 = vmax.f32 %v895, 0.0
    %v911 = vmax.f32 %v848, 0.0
    %v912 = vmax.f32 %v850, 0.0
    %v913 = vmax.f32 %v898, 0.0
    %v914 = vmax.f32 %v854, 0.0
    %v915 = vmax.f32 %v856, 0.0
    %v916 = vmax.f32 %v903, 0.0
    %917 = vst [vmem:[#allocation8] sm:$0xff] %v908
    %918 = vst [vmem:[#allocation8 + $0x8] sm:$0xff] %v909
    %919 = vst [vmem:[#allocation8 + $0x10] sm:$0xff] %v910
    %920 = vst [vmem:[#allocation8 + $0x18] sm:$0xff] %v911
    %921 = vst [vmem:[#allocation8 + $0x20] sm:$0xff] %v912
    %922 = vst [vmem:[#allocation8 + $0x28] sm:$0xff] %v913
    %923 = vst [vmem:[#allocation8 + $0x30] sm:$0xff] %v914
    %924 = vst [vmem:[#allocation8 + $0x38] sm:$0xff] %v915
    %925 = vst [vmem:[#allocation8 + $0x40] sm:$0xff] %v916
    // Predicated region
    $region50: #{tpu_custom_call.1} parent=1 // pred_check
      _
    $region51: #{tpu_custom_call.1} parent=1 // pred_check_branch
      %927 = sbr.rel (0) target = $region53
    $region52: #{tpu_custom_call.1} parent=1 // pred_region
      %s929 = ssub.s32 1152, 1152
      %930 = vsyncadd [#allocation4], %s929
      %s931 = sshll.u32 [#allocation8], 4
      %s932 = int_to_ptr.vmem [resolvable:$true] %s931
      %937 = dma.vmem_to_hbm [thread:$0]  %s932, 1152, %s9, [#allocation4], 384, 384, 24
    $region53: #{tpu_custom_call.1} parent=1 // pred_fallthru
      _
    // Predicated region
    $region54: #{tpu_custom_call.1} parent=1 // pred_check
      _
    $region55: #{tpu_custom_call.1} parent=1 // pred_check_branch
      %939 = sbr.rel (0) target = $region57
    $region56: #{tpu_custom_call.1} parent=1 // pred_region
      %940 = dma.done [#allocation4], 1152
    $region57: #{tpu_custom_call.1} parent=1 // pred_fallthru
      _
    %941 = vsyncpa [#allocation3], 1
    %942 = vsyncpa [#allocation6], 1
    %943 = vsyncpa [#allocation4], 1

</llo_original>
